<compile_context>
chip_gen: v7x
topology: tpu7x:2x2x1
jax: 0.10.0
libtpu: 0.0.40
codegen_flags: <defaults>
</compile_context>

<pallas_src>
import functools

import jax
import jax.numpy as jnp
from jax import lax
from jax.experimental import pallas as pl
from jax.experimental.pallas import tpu as pltpu


def _concat_conv_kernel(x_ref, wcol_ref, w_ref, b_ref, o_ref, *, H, W, C, Cout):
    """One batch element per grid step.

    x_ref:    (C, H*W)       input plane: channels on sublanes, pixels on lanes
    wcol_ref: (1, H*W)       w-coordinate of each flattened pixel (int32)
    w_ref:    (9, Cout, C)   conv weight, one (Cout, Cin) matrix per 3x3 tap
    b_ref:    (Cout, 1)      conv bias
    o_ref:    (C+Cout, H*W)  [identity | conv] output (== NCHW-flat)
    """
    HW = H * W
    x = x_ref[...]

    # identity branch: direct slice store, no in-kernel concatenate
    o_ref[0:C, :] = x.astype(o_ref.dtype)

    # flat pixel index (for +/-1 row masks) and w coordinate (for +/-1 col masks)
    pix = lax.broadcasted_iota(jnp.int32, (1, HW), 1)
    wcol = wcol_ref[...]

    acc = jnp.zeros((Cout, HW), dtype=jnp.float32)
    t = 0
    for dh in (-1, 0, 1):
        for dw in (-1, 0, 1):
            s = dh * W + dw                          # flat offset of this tap
            if s == 0:
                tap = x
            else:
                # want tap[p] = x[p + s]; jnp.roll semantics: out[i] = in[i - shift]
                tap = pltpu.roll(x, (-s) % HW, 1)

            valid = None                             # static (Python) mask construction
            if dh == -1:
                valid = pix >= W                     # h - 1 >= 0
            elif dh == 1:
                valid = pix < HW - W                 # h + 1 <= H - 1
            if dw == -1:
                vw = wcol >= 1                       # w - 1 >= 0
                valid = vw if valid is None else (valid & vw)
            elif dw == 1:
                vw = wcol <= W - 2                   # w + 1 <= W - 1
                valid = vw if valid is None else (valid & vw)
            if valid is not None:
                tap = jnp.where(jnp.broadcast_to(valid, tap.shape),
                                tap, jnp.zeros_like(tap))

            # (Cout, C) @ (C, HW) -> (Cout, HW); f32 accumulation on the MXU
            acc = acc + jnp.dot(w_ref[t], tap, preferred_element_type=jnp.float32)
            t += 1

    acc = acc + b_ref[...]                           # (Cout, 1) broadcast over lanes
    o_ref[C:, :] = acc.astype(o_ref.dtype)


def concat_block_forward(x_nchw, w_hwio, b):
    """x_nchw: (N, C, H, W).  Conv2d(C->Cout, 3x3, stride 1, pad 1), then channel concat.

    Returns (N, C + Cout, H, W) in the input dtype.
    """
    N, C, H, W = x_nchw.shape
    kh, kw, cin, cout = w_hwio.shape
    assert (kh, kw, cin) == (3, 3, C)
    HW = H * W

    # Free views: NCHW is already contiguous as (N, C, H*W) / (N, C+Cout, H*W).
    x_flat = x_nchw.reshape(N, C, HW)
    # Per-tap (Cout, Cin) matrices; tap index t = kh*3 + kw matches the kernel loop.
    w_taps = jnp.transpose(w_hwio, (0, 1, 3, 2)).reshape(9, cout, C)
    b_col = b.reshape(cout, 1)
    # w coordinate of each flattened pixel (tiny, avoids in-kernel int div/mod).
    wcol = jnp.tile(jnp.arange(W, dtype=jnp.int32), H).reshape(1, HW)

    out_c = C + cout
    kernel = functools.partial(_concat_conv_kernel, H=H, W=W, C=C, Cout=cout)

    # TODO(synk): for very large per-image planes (C*H*W*4 bytes beyond a few MiB of
    # VMEM), tile the H axis with a +/-1-row halo instead of one grid step per image.
    out_flat = pl.pallas_call(
        kernel,
        out_shape=jax.ShapeDtypeStruct((N, out_c, HW), x_nchw.dtype),
        grid_spec=pltpu.PrefetchScalarGridSpec(
            num_scalar_prefetch=0,
            grid=(N,),
            in_specs=[
                pl.BlockSpec((None, C, HW), lambda n: (n, 0, 0)),   # x plane
                pl.BlockSpec((1, HW), lambda n: (0, 0)),            # w coordinates
                pl.BlockSpec((9, cout, C), lambda n: (0, 0, 0)),    # weights (resident)
                pl.BlockSpec((cout, 1), lambda n: (0, 0)),          # bias
            ],
            out_specs=pl.BlockSpec((None, out_c, HW), lambda n: (n, 0, 0)),
        ),
        compiler_params=pltpu.CompilerParams(
            dimension_semantics=("parallel",),   # batch axis shards across v7x's 2 TCs
        ),
    )(x_flat, wcol, w_taps, b_col)

    return out_flat.reshape(N, out_c, H, W)


def _reference(x_nchw, w_hwio, b):
    conv = lax.conv_general_dilated(
        x_nchw, w_hwio,
        window_strides=(1, 1), padding="SAME",
        dimension_numbers=("NCHW", "HWIO", "NCHW"),
    ) + b.reshape(1, -1, 1, 1)
    return jnp.concatenate([x_nchw, conv], axis=1)


if __name__ == "__main__":
    N, C, H, W = 2, 4, 16, 16
    key = jax.random.PRNGKey(0)
    kx, kw_, kb = jax.random.split(key, 3)

    x = jax.random.normal(kx, (N, C, H, W), dtype=jnp.float32)
    # Deterministic synthetic parameters for the Conv2d(C, C, 3, padding=1) submodule.
    w_hwio = 0.1 * jax.random.normal(kw_, (3, 3, C, C), dtype=jnp.float32)
    b = 0.05 * jax.random.normal(kb, (C,), dtype=jnp.float32)

    out = jax.block_until_ready(concat_block_forward(x, w_hwio, b))
    ref = _reference(x, w_hwio, b)

    assert out.shape == (N, 2 * C, H, W)
    assert jnp.allclose(out, ref, atol=1e-4, rtol=1e-4)
    print("KERNEL_OK")
</pallas_src>

<mosaic_0001>
module attributes {stable_mosaic.version = 11 : i64} {
  func.func @_concat_conv_kernel(%arg0: i32, %arg1: memref<1x4x256xf32, #tpu.memory_space<vmem>>, %arg2: memref<1x256xi32, #tpu.memory_space<vmem>>, %arg3: memref<9x4x4xf32, #tpu.memory_space<vmem>>, %arg4: memref<4x1xf32, #tpu.memory_space<vmem>>, %arg5: memref<1x8x256xf32, #tpu.memory_space<vmem>>) attributes {dimension_semantics = [#tpu.dimension_semantics<parallel>], iteration_bounds = array<i64: 2>, scalar_prefetch = 0 : i64, scratch_operands = 0 : i64, tpu.core_type = #tpu.core_type<tc>, window_params = [{transform_indices = @transform_0, window_bounds = array<i64: 1, 4, 256>}, {pipeline_mode = #tpu.pipeline_mode<synchronous>, transform_indices = @transform_1, window_bounds = array<i64: 1, 256>}, {pipeline_mode = #tpu.pipeline_mode<synchronous>, transform_indices = @transform_2, window_bounds = array<i64: 9, 4, 4>}, {pipeline_mode = #tpu.pipeline_mode<synchronous>, transform_indices = @transform_3, window_bounds = array<i64: 4, 1>}, {transform_indices = @transform_4, window_bounds = array<i64: 1, 8, 256>}]} {
    %c0 = arith.constant 0 : index
    %c0_0 = arith.constant 0 : index
    %c0_1 = arith.constant 0 : index
    %0 = vector.load %arg1[%c0, %c0_0, %c0_1] : memref<1x4x256xf32, #tpu.memory_space<vmem>>, vector<1x4x256xf32>
    %1 = vector.shape_cast %0 : vector<1x4x256xf32> to vector<4x256xf32>
    %c0_2 = arith.constant 0 : index
    %c0_3 = arith.constant 0 : index
    %c0_4 = arith.constant 0 : index
    %2 = vector.load %arg5[%c0_2, %c0_3, %c0_4] : memref<1x8x256xf32, #tpu.memory_space<vmem>>, vector<1x4x256xf32>
    %3 = vector.shape_cast %2 : vector<1x4x256xf32> to vector<4x256xf32>
    %4 = vector.shape_cast %1 : vector<4x256xf32> to vector<1x4x256xf32>
    tpu.vector_store %arg5[%c0_2, %c0_3, %c0_4], %4 {strides = array<i32>} : memref<1x8x256xf32, #tpu.memory_space<vmem>>, vector<1x4x256xf32>,
    %5 = tpu.iota {dimensions = array<i32: 1>} : vector<1x256xi32>
    %c0_5 = arith.constant 0 : index
    %c0_6 = arith.constant 0 : index
    %6 = vector.load %arg2[%c0_5, %c0_6] : memref<1x256xi32, #tpu.memory_space<vmem>>, vector<1x256xi32>
    %cst = arith.constant 0.000000e+00 : f32
    %7 = vector.broadcast %cst : f32 to vector<4x256xf32>
    %c17_i32 = arith.constant 17 : i32
    %8 = tpu.dynamic_rotate %1 by %c17_i32 dim 1 : vector<4x256xf32>, i32 -> vector<4x256xf32>
    %c16_i32 = arith.constant 16 : i32
    %9 = vector.broadcast %c16_i32 : i32 to vector<1x256xi32>
    %10 = arith.cmpi sge, %5, %9 : vector<1x256xi32>
    %c1_i32 = arith.constant 1 : i32
    %11 = vector.broadcast %c1_i32 : i32 to vector<1x256xi32>
    %12 = arith.cmpi sge, %6, %11 : vector<1x256xi32>
    %13 = arith.andi %10, %12 : vector<1x256xi1>
    %14 = vector.shape_cast %13 : vector<1x256xi1> to vector<1x256xi1>
    %15 = vector.broadcast %14 : vector<1x256xi1> to vector<4x256xi1>
    %cst_7 = arith.constant 0.000000e+00 : f32
    %16 = vector.broadcast %cst_7 : f32 to vector<4x256xf32>
    %17 = arith.select %15, %8, %16 : vector<4x256xi1>, vector<4x256xf32>
    %c0_8 = arith.constant 0 : index
    %c0_9 = arith.constant 0 : index
    %c0_10 = arith.constant 0 : index
    %18 = vector.load %arg3[%c0_8, %c0_9, %c0_10] : memref<9x4x4xf32, #tpu.memory_space<vmem>>, vector<1x4x4xf32>
    %19 = vector.shape_cast %18 : vector<1x4x4xf32> to vector<4x4xf32>
    %cst_11 = arith.constant dense<0.000000e+00> : vector<4x256xf32>
    %20 = tpu.matmul %19, %17, %cst_11 {dimension_numbers = #tpu.dot_dimension_numbers<[1], [0], [0], [1], [0, 0, 1, 1], [], []>} : vector<4x4xf32>, vector<4x256xf32>, vector<4x256xf32> -> vector<4x256xf32>
    %21 = arith.addf %7, %20 : vector<4x256xf32>
    %c16_i32_12 = arith.constant 16 : i32
    %22 = tpu.dynamic_rotate %1 by %c16_i32_12 dim 1 : vector<4x256xf32>, i32 -> vector<4x256xf32>
    %c16_i32_13 = arith.constant 16 : i32
    %23 = vector.broadcast %c16_i32_13 : i32 to vector<1x256xi32>
    %24 = arith.cmpi sge, %5, %23 : vector<1x256xi32>
    %25 = vector.shape_cast %24 : vector<1x256xi1> to vector<1x256xi1>
    %26 = vector.broadcast %25 : vector<1x256xi1> to vector<4x256xi1>
    %cst_14 = arith.constant 0.000000e+00 : f32
    %27 = vector.broadcast %cst_14 : f32 to vector<4x256xf32>
    %28 = arith.select %26, %22, %27 : vector<4x256xi1>, vector<4x256xf32>
    %c1 = arith.constant 1 : index
    %c0_15 = arith.constant 0 : index
    %c0_16 = arith.constant 0 : index
    %29 = vector.load %arg3[%c1, %c0_15, %c0_16] : memref<9x4x4xf32, #tpu.memory_space<vmem>>, vector<1x4x4xf32>
    %30 = vector.shape_cast %29 : vector<1x4x4xf32> to vector<4x4xf32>
    %cst_17 = arith.constant dense<0.000000e+00> : vector<4x256xf32>
    %31 = tpu.matmul %30, %28, %cst_17 {dimension_numbers = #tpu.dot_dimension_numbers<[1], [0], [0], [1], [0, 0, 1, 1], [], []>} : vector<4x4xf32>, vector<4x256xf32>, vector<4x256xf32> -> vector<4x256xf32>
    %32 = arith.addf %21, %31 : vector<4x256xf32>
    %c15_i32 = arith.constant 15 : i32
    %33 = tpu.dynamic_rotate %1 by %c15_i32 dim 1 : vector<4x256xf32>, i32 -> vector<4x256xf32>
    %c16_i32_18 = arith.constant 16 : i32
    %34 = vector.broadcast %c16_i32_18 : i32 to vector<1x256xi32>
    %35 = arith.cmpi sge, %5, %34 : vector<1x256xi32>
    %c14_i32 = arith.constant 14 : i32
    %36 = vector.broadcast %c14_i32 : i32 to vector<1x256xi32>
    %37 = arith.cmpi sle, %6, %36 : vector<1x256xi32>
    %38 = arith.andi %35, %37 : vector<1x256xi1>
    %39 = vector.shape_cast %38 : vector<1x256xi1> to vector<1x256xi1>
    %40 = vector.broadcast %39 : vector<1x256xi1> to vector<4x256xi1>
    %cst_19 = arith.constant 0.000000e+00 : f32
    %41 = vector.broadcast %cst_19 : f32 to vector<4x256xf32>
    %42 = arith.select %40, %33, %41 : vector<4x256xi1>, vector<4x256xf32>
    %c2 = arith.constant 2 : index
    %c0_20 = arith.constant 0 : index
    %c0_21 = arith.constant 0 : index
    %43 = vector.load %arg3[%c2, %c0_20, %c0_21] : memref<9x4x4xf32, #tpu.memory_space<vmem>>, vector<1x4x4xf32>
    %44 = vector.shape_cast %43 : vector<1x4x4xf32> to vector<4x4xf32>
    %cst_22 = arith.constant dense<0.000000e+00> : vector<4x256xf32>
    %45 = tpu.matmul %44, %42, %cst_22 {dimension_numbers = #tpu.dot_dimension_numbers<[1], [0], [0], [1], [0, 0, 1, 1], [], []>} : vector<4x4xf32>, vector<4x256xf32>, vector<4x256xf32> -> vector<4x256xf32>
    %46 = arith.addf %32, %45 : vector<4x256xf32>
    %c1_i32_23 = arith.constant 1 : i32
    %47 = tpu.dynamic_rotate %1 by %c1_i32_23 dim 1 : vector<4x256xf32>, i32 -> vector<4x256xf32>
    %c1_i32_24 = arith.constant 1 : i32
    %48 = vector.broadcast %c1_i32_24 : i32 to vector<1x256xi32>
    %49 = arith.cmpi sge, %6, %48 : vector<1x256xi32>
    %50 = vector.shape_cast %49 : vector<1x256xi1> to vector<1x256xi1>
    %51 = vector.broadcast %50 : vector<1x256xi1> to vector<4x256xi1>
    %cst_25 = arith.constant 0.000000e+00 : f32
    %52 = vector.broadcast %cst_25 : f32 to vector<4x256xf32>
    %53 = arith.select %51, %47, %52 : vector<4x256xi1>, vector<4x256xf32>
    %c3 = arith.constant 3 : index
    %c0_26 = arith.constant 0 : index
    %c0_27 = arith.constant 0 : index
    %54 = vector.load %arg3[%c3, %c0_26, %c0_27] : memref<9x4x4xf32, #tpu.memory_space<vmem>>, vector<1x4x4xf32>
    %55 = vector.shape_cast %54 : vector<1x4x4xf32> to vector<4x4xf32>
    %cst_28 = arith.constant dense<0.000000e+00> : vector<4x256xf32>
    %56 = tpu.matmul %55, %53, %cst_28 {dimension_numbers = #tpu.dot_dimension_numbers<[1], [0], [0], [1], [0, 0, 1, 1], [], []>} : vector<4x4xf32>, vector<4x256xf32>, vector<4x256xf32> -> vector<4x256xf32>
    %57 = arith.addf %46, %56 : vector<4x256xf32>
    %c4 = arith.constant 4 : index
    %c0_29 = arith.constant 0 : index
    %c0_30 = arith.constant 0 : index
    %58 = vector.load %arg3[%c4, %c0_29, %c0_30] : memref<9x4x4xf32, #tpu.memory_space<vmem>>, vector<1x4x4xf32>
    %59 = vector.shape_cast %58 : vector<1x4x4xf32> to vector<4x4xf32>
    %cst_31 = arith.constant dense<0.000000e+00> : vector<4x256xf32>
    %60 = tpu.matmul %59, %1, %cst_31 {dimension_numbers = #tpu.dot_dimension_numbers<[1], [0], [0], [1], [0, 0, 1, 1], [], []>} : vector<4x4xf32>, vector<4x256xf32>, vector<4x256xf32> -> vector<4x256xf32>
    %61 = arith.addf %57, %60 : vector<4x256xf32>
    %c255_i32 = arith.constant 255 : i32
    %62 = tpu.dynamic_rotate %1 by %c255_i32 dim 1 : vector<4x256xf32>, i32 -> vector<4x256xf32>
    %c14_i32_32 = arith.constant 14 : i32
    %63 = vector.broadcast %c14_i32_32 : i32 to vector<1x256xi32>
    %64 = arith.cmpi sle, %6, %63 : vector<1x256xi32>
    %65 = vector.shape_cast %64 : vector<1x256xi1> to vector<1x256xi1>
    %66 = vector.broadcast %65 : vector<1x256xi1> to vector<4x256xi1>
    %cst_33 = arith.constant 0.000000e+00 : f32
    %67 = vector.broadcast %cst_33 : f32 to vector<4x256xf32>
    %68 = arith.select %66, %62, %67 : vector<4x256xi1>, vector<4x256xf32>
    %c5 = arith.constant 5 : index
    %c0_34 = arith.constant 0 : index
    %c0_35 = arith.constant 0 : index
    %69 = vector.load %arg3[%c5, %c0_34, %c0_35] : memref<9x4x4xf32, #tpu.memory_space<vmem>>, vector<1x4x4xf32>
    %70 = vector.shape_cast %69 : vector<1x4x4xf32> to vector<4x4xf32>
    %cst_36 = arith.constant dense<0.000000e+00> : vector<4x256xf32>
    %71 = tpu.matmul %70, %68, %cst_36 {dimension_numbers = #tpu.dot_dimension_numbers<[1], [0], [0], [1], [0, 0, 1, 1], [], []>} : vector<4x4xf32>, vector<4x256xf32>, vector<4x256xf32> -> vector<4x256xf32>
    %72 = arith.addf %61, %71 : vector<4x256xf32>
    %c241_i32 = arith.constant 241 : i32
    %73 = tpu.dynamic_rotate %1 by %c241_i32 dim 1 : vector<4x256xf32>, i32 -> vector<4x256xf32>
    %c240_i32 = arith.constant 240 : i32
    %74 = vector.broadcast %c240_i32 : i32 to vector<1x256xi32>
    %75 = arith.cmpi slt, %5, %74 : vector<1x256xi32>
    %c1_i32_37 = arith.constant 1 : i32
    %76 = vector.broadcast %c1_i32_37 : i32 to vector<1x256xi32>
    %77 = arith.cmpi sge, %6, %76 : vector<1x256xi32>
    %78 = arith.andi %75, %77 : vector<1x256xi1>
    %79 = vector.shape_cast %78 : vector<1x256xi1> to vector<1x256xi1>
    %80 = vector.broadcast %79 : vector<1x256xi1> to vector<4x256xi1>
    %cst_38 = arith.constant 0.000000e+00 : f32
    %81 = vector.broadcast %cst_38 : f32 to vector<4x256xf32>
    %82 = arith.select %80, %73, %81 : vector<4x256xi1>, vector<4x256xf32>
    %c6 = arith.constant 6 : index
    %c0_39 = arith.constant 0 : index
    %c0_40 = arith.constant 0 : index
    %83 = vector.load %arg3[%c6, %c0_39, %c0_40] : memref<9x4x4xf32, #tpu.memory_space<vmem>>, vector<1x4x4xf32>
    %84 = vector.shape_cast %83 : vector<1x4x4xf32> to vector<4x4xf32>
    %cst_41 = arith.constant dense<0.000000e+00> : vector<4x256xf32>
    %85 = tpu.matmul %84, %82, %cst_41 {dimension_numbers = #tpu.dot_dimension_numbers<[1], [0], [0], [1], [0, 0, 1, 1], [], []>} : vector<4x4xf32>, vector<4x256xf32>, vector<4x256xf32> -> vector<4x256xf32>
    %86 = arith.addf %72, %85 : vector<4x256xf32>
    %c240_i32_42 = arith.constant 240 : i32
    %87 = tpu.dynamic_rotate %1 by %c240_i32_42 dim 1 : vector<4x256xf32>, i32 -> vector<4x256xf32>
    %c240_i32_43 = arith.constant 240 : i32
    %88 = vector.broadcast %c240_i32_43 : i32 to vector<1x256xi32>
    %89 = arith.cmpi slt, %5, %88 : vector<1x256xi32>
    %90 = vector.shape_cast %89 : vector<1x256xi1> to vector<1x256xi1>
    %91 = vector.broadcast %90 : vector<1x256xi1> to vector<4x256xi1>
    %cst_44 = arith.constant 0.000000e+00 : f32
    %92 = vector.broadcast %cst_44 : f32 to vector<4x256xf32>
    %93 = arith.select %91, %87, %92 : vector<4x256xi1>, vector<4x256xf32>
    %c7 = arith.constant 7 : index
    %c0_45 = arith.constant 0 : index
    %c0_46 = arith.constant 0 : index
    %94 = vector.load %arg3[%c7, %c0_45, %c0_46] : memref<9x4x4xf32, #tpu.memory_space<vmem>>, vector<1x4x4xf32>
    %95 = vector.shape_cast %94 : vector<1x4x4xf32> to vector<4x4xf32>
    %cst_47 = arith.constant dense<0.000000e+00> : vector<4x256xf32>
    %96 = tpu.matmul %95, %93, %cst_47 {dimension_numbers = #tpu.dot_dimension_numbers<[1], [0], [0], [1], [0, 0, 1, 1], [], []>} : vector<4x4xf32>, vector<4x256xf32>, vector<4x256xf32> -> vector<4x256xf32>
    %97 = arith.addf %86, %96 : vector<4x256xf32>
    %c239_i32 = arith.constant 239 : i32
    %98 = tpu.dynamic_rotate %1 by %c239_i32 dim 1 : vector<4x256xf32>, i32 -> vector<4x256xf32>
    %c240_i32_48 = arith.constant 240 : i32
    %99 = vector.broadcast %c240_i32_48 : i32 to vector<1x256xi32>
    %100 = arith.cmpi slt, %5, %99 : vector<1x256xi32>
    %c14_i32_49 = arith.constant 14 : i32
    %101 = vector.broadcast %c14_i32_49 : i32 to vector<1x256xi32>
    %102 = arith.cmpi sle, %6, %101 : vector<1x256xi32>
    %103 = arith.andi %100, %102 : vector<1x256xi1>
    %104 = vector.shape_cast %103 : vector<1x256xi1> to vector<1x256xi1>
    %105 = vector.broadcast %104 : vector<1x256xi1> to vector<4x256xi1>
    %cst_50 = arith.constant 0.000000e+00 : f32
    %106 = vector.broadcast %cst_50 : f32 to vector<4x256xf32>
    %107 = arith.select %105, %98, %106 : vector<4x256xi1>, vector<4x256xf32>
    %c8 = arith.constant 8 : index
    %c0_51 = arith.constant 0 : index
    %c0_52 = arith.constant 0 : index
    %108 = vector.load %arg3[%c8, %c0_51, %c0_52] : memref<9x4x4xf32, #tpu.memory_space<vmem>>, vector<1x4x4xf32>
    %109 = vector.shape_cast %108 : vector<1x4x4xf32> to vector<4x4xf32>
    %cst_53 = arith.constant dense<0.000000e+00> : vector<4x256xf32>
    %110 = tpu.matmul %109, %107, %cst_53 {dimension_numbers = #tpu.dot_dimension_numbers<[1], [0], [0], [1], [0, 0, 1, 1], [], []>} : vector<4x4xf32>, vector<4x256xf32>, vector<4x256xf32> -> vector<4x256xf32>
    %111 = arith.addf %97, %110 : vector<4x256xf32>
    %c0_54 = arith.constant 0 : index
    %c0_55 = arith.constant 0 : index
    %112 = vector.load %arg4[%c0_54, %c0_55] : memref<4x1xf32, #tpu.memory_space<vmem>>, vector<4x1xf32>
    %113 = vector.broadcast %112 : vector<4x1xf32> to vector<4x256xf32>
    %114 = arith.addf %111, %113 : vector<4x256xf32>
    %c0_56 = arith.constant 0 : index
    %c4_57 = arith.constant 4 : index
    %c0_58 = arith.constant 0 : index
    %115 = vector.load %arg5[%c0_56, %c4_57, %c0_58] : memref<1x8x256xf32, #tpu.memory_space<vmem>>, vector<1x4x256xf32>
    %116 = vector.shape_cast %115 : vector<1x4x256xf32> to vector<4x256xf32>
    %117 = vector.shape_cast %114 : vector<4x256xf32> to vector<1x4x256xf32>
    tpu.vector_store %arg5[%c0_56, %c4_57, %c0_58], %117 {strides = array<i32>} : memref<1x8x256xf32, #tpu.memory_space<vmem>>, vector<1x4x256xf32>,
    return
  }
  func.func @transform_0(%arg0: i32) -> (i32, i32, i32) {
    %c0_i32 = arith.constant 0 : i32
    %c0_i32_0 = arith.constant 0 : i32
    %c0_i32_1 = arith.constant 0 : i32
    return %arg0, %c0_i32, %c0_i32_0 : i32, i32, i32
  }
  func.func @transform_1(%arg0: i32) -> (i32, i32) {
    %c0_i32 = arith.constant 0 : i32
    %c0_i32_0 = arith.constant 0 : i32
    %c0_i32_1 = arith.constant 0 : i32
    return %c0_i32, %c0_i32_0 : i32, i32
  }
  func.func @transform_2(%arg0: i32) -> (i32, i32, i32) {
    %c0_i32 = arith.constant 0 : i32
    %c0_i32_0 = arith.constant 0 : i32
    %c0_i32_1 = arith.constant 0 : i32
    %c0_i32_2 = arith.constant 0 : i32
    return %c0_i32, %c0_i32_0, %c0_i32_1 : i32, i32, i32
  }
  func.func @transform_3(%arg0: i32) -> (i32, i32) {
    %c0_i32 = arith.constant 0 : i32
    %c0_i32_0 = arith.constant 0 : i32
    %c0_i32_1 = arith.constant 0 : i32
    return %c0_i32, %c0_i32_0 : i32, i32
  }
  func.func @transform_4(%arg0: i32) -> (i32, i32, i32) {
    %c0_i32 = arith.constant 0 : i32
    %c0_i32_0 = arith.constant 0 : i32
    %c0_i32_1 = arith.constant 0 : i32
    return %arg0, %c0_i32, %c0_i32_0 : i32, i32, i32
  }
}

</mosaic_0001>

<llo_original>
// kernel: tpu_custom_call.1
$region0: #{tpu_custom_call.1}
  #allocation0 [shape = 'u32[]', space=smem, size = 0x4, offset = 0x4, fixed_abs, tag = 'smem constant byte address 0x4 - core index']
  #allocation1 [shape = 'u32[144,128]{1,0:T(1,128)}', space=vmem, size = 0x12000, scoped, tag = 'internal scratch']
  %s0 = inlined_call_operand.vmem [shape: f32[2,4,256], index: 0, kind: input, shape index: {}]
  %s1 = inlined_call_operand.vmem [shape: s32[1,256], index: 1, kind: input, shape index: {}]
  %s2 = inlined_call_operand.vmem [shape: f32[9,4,4], index: 2, kind: input, shape index: {}]
  %s3 = inlined_call_operand.vmem [shape: f32[4,1], index: 3, kind: input, shape index: {}]
  %s4 = inlined_call_operand.hbm [shape: f32[2,8,256], index: 4, kind: output, shape index: {}]
  %s5 = sld [smem:[#allocation0]]
  $region49: #{tpu_custom_call.1} parent=0
    _
  %s7 = ssub.s32 1, %s5
  %s8 = scalar_select 0, %s7, %s5
  $region1: #{tpu_custom_call.1} parent=0
    #allocation2 [shape = 'u8[16384]{0}', space=vmem, size = 0x4000, scoped, tag = 'output window, operand 0']
    #allocation3 [shape = 's32[2]{0}', space=sflag, size = 0x8, scoped, tag = 'scoped memory for tpu_custom_call.1']
    %9 = vsyncpa [#allocation3], 0
    %s10 = scalar_lea.sflag [#allocation3], 1
    %11 = vsyncpa %s10, 0
    loop: start=0, step=1, limit=4
    $region2: #{tpu_custom_call.1} parent=1 // loop_pre_header
      _
    $region3: #{tpu_custom_call.1} parent=1 // loop_header
      %s13 = sphi 0, %s17
      %p14 = scmp.ge.s32.totalorder %s13, 4
      %s23 = sphi 0, %s25
      %s26 = sphi 0, %s23
      %s27 = sphi 0, %s26
      %s43 = sphi 0, %s27
      %s47 = sphi 0, %s47
      %s49 = sphi 0, %s47
      %s50 = sphi 0, %s49
      %s64 = sphi 0, %s50
      %s68 = sphi 0, %s68
      %s70 = sphi 0, %s68
      %s71 = sphi 0, %s70
      %s85 = sphi 0, %s71
      %s89 = sphi 0, %s89
      %s91 = sphi 0, %s89
      %s92 = sphi 0, %s91
      %s106 = sphi 0, %s92
      %s112 = sphi 0, %s114
      %s115 = sphi 0, %s112
      %s116 = sphi 0, %s115
      %s132 = sphi 0, %s116
    $region4: #{tpu_custom_call.1} parent=1 // loop_header_branch
      %16 = sbr.rel (%p14) target = $region8
    $region5: #{tpu_custom_call.1} parent=1 // loop_body
      %s18 = ssub.s32 %s13, 1
      %s19 = ssub.s32 %s13, 2
      %s20 = sadd.s32 %s13, 1
      %s21 = ssub.s32 %s13, %s20
      %p22 = scmp.eq.s32.totalorder %s21, 0
      %s24 = sadd.s32 %s23, 1
      %s25 = scalar_select %p22, %s23, %s24
      %p28 = pneg %p22
      %p29 = scmp.eq.s32.totalorder %s13, 1
      %p30 = por %p28, %p29
      %p31 = scmp.ne.s32.totalorder %s23, %s26
      %p32 = scmp.eq.s32.totalorder %s13, 0
      %p33 = por %p31, %p32
      %p34 = scmp.ne.s32.totalorder %s23, %s26
      %p35 = scmp.eq.s32.totalorder %s18, 1
      %p36 = por %p34, %p35
      %p37 = scmp.ne.s32.totalorder %s26, %s27
      %p38 = scmp.eq.s32.totalorder %s18, 0
      %p39 = por %p37, %p38
      %p40 = scmp.ne.s32.totalorder %s26, %s27
      %p41 = scmp.eq.s32.totalorder %s19, 1
      %p42 = por %p40, %p41
      %p44 = scmp.ne.s32.totalorder %s27, %s43
      %p45 = scmp.eq.s32.totalorder %s19, 0
      %p46 = por %p44, %p45
      %s48 = sadd.s32 %s47, 1
      %p51 = scmp.eq.s32.totalorder %s13, 1
      %p52 = scmp.ne.s32.totalorder %s47, %s49
      %p53 = scmp.eq.s32.totalorder %s13, 0
      %p54 = por %p52, %p53
      %p55 = scmp.ne.s32.totalorder %s47, %s49
      %p56 = scmp.eq.s32.totalorder %s18, 1
      %p57 = por %p55, %p56
      %p58 = scmp.ne.s32.totalorder %s49, %s50
      %p59 = scmp.eq.s32.totalorder %s18, 0
      %p60 = por %p58, %p59
      %p61 = scmp.ne.s32.totalorder %s49, %s50
      %p62 = scmp.eq.s32.totalorder %s19, 1
      %p63 = por %p61, %p62
      %p65 = scmp.ne.s32.totalorder %s50, %s64
      %p66 = scmp.eq.s32.totalorder %s19, 0
      %p67 = por %p65, %p66
      %s69 = sadd.s32 %s68, 1
      %p72 = scmp.eq.s32.totalorder %s13, 1
      %p73 = scmp.ne.s32.totalorder %s68, %s70
      %p74 = scmp.eq.s32.totalorder %s13, 0
      %p75 = por %p73, %p74
      %p76 = scmp.ne.s32.totalorder %s68, %s70
      %p77 = scmp.eq.s32.totalorder %s18, 1
      %p78 = por %p76, %p77
      %p79 = scmp.ne.s32.totalorder %s70, %s71
      %p80 = scmp.eq.s32.totalorder %s18, 0
      %p81 = por %p79, %p80
      %p82 = scmp.ne.s32.totalorder %s70, %s71
      %p83 = scmp.eq.s32.totalorder %s19, 1
      %p84 = por %p82, %p83
      %p86 = scmp.ne.s32.totalorder %s71, %s85
      %p87 = scmp.eq.s32.totalorder %s19, 0
      %p88 = por %p86, %p87
      %s90 = sadd.s32 %s89, 1
      %p93 = scmp.eq.s32.totalorder %s13, 1
      %p94 = scmp.ne.s32.totalorder %s89, %s91
      %p95 = scmp.eq.s32.totalorder %s13, 0
      %p96 = por %p94, %p95
      %p97 = scmp.ne.s32.totalorder %s89, %s91
      %p98 = scmp.eq.s32.totalorder %s18, 1
      %p99 = por %p97, %p98
      %p100 = scmp.ne.s32.totalorder %s91, %s92
      %p101 = scmp.eq.s32.totalorder %s18, 0
      %p102 = por %p100, %p101
      %p103 = scmp.ne.s32.totalorder %s91, %s92
      %p104 = scmp.eq.s32.totalorder %s19, 1
      %p105 = por %p103, %p104
      %p107 = scmp.ne.s32.totalorder %s92, %s106
      %p108 = scmp.eq.s32.totalorder %s19, 0
      %p109 = por %p107, %p108
      %s110 = ssub.s32 %s13, %s20
      %p111 = scmp.eq.s32.totalorder %s110, 0
      %s113 = sadd.s32 %s112, 1
      %s114 = scalar_select %p111, %s112, %s113
      %p117 = pneg %p111
      %p118 = scmp.eq.s32.totalorder %s13, 1
      %p119 = por %p117, %p118
      %p120 = scmp.ne.s32.totalorder %s112, %s115
      %p121 = scmp.eq.s32.totalorder %s13, 0
      %p122 = por %p120, %p121
      %p123 = scmp.ne.s32.totalorder %s112, %s115
      %p124 = scmp.eq.s32.totalorder %s18, 1
      %p125 = por %p123, %p124
      %p126 = scmp.ne.s32.totalorder %s115, %s116
      %p127 = scmp.eq.s32.totalorder %s18, 0
      %p128 = por %p126, %p127
      %p129 = scmp.ne.s32.totalorder %s115, %s116
      %p130 = scmp.eq.s32.totalorder %s19, 1
      %p131 = por %p129, %p130
      %p133 = scmp.ne.s32.totalorder %s116, %s132
      %p134 = scmp.eq.s32.totalorder %s19, 0
      %p135 = por %p133, %p134
      %p136 = scmp.le.s32.totalorder 1, %s13
      %p137 = scmp.lt.s32.totalorder %s13, 3
      %p138 = pnand %p136, %p137
      %p139 = pneg %p138
      // Predicated region
      $region9: #{tpu_custom_call.1} parent=5 // pred_check
        _
      $region10: #{tpu_custom_call.1} parent=5 // pred_check_branch
        %141 = sbr.rel (%p138) target = $region12
      $region11: #{tpu_custom_call.1} parent=5 // pred_region
        %s142 = ssub.s32 %s13, 1
        // Predicated region
        $region13: #{tpu_custom_call.1} parent=11 // pred_check
          %p143 = pneg %p60
        $region14: #{tpu_custom_call.1} parent=11 // pred_check_branch
          %145 = sbr.rel (%p143) target = $region16
        $region15: #{tpu_custom_call.1} parent=11 // pred_region
          _
        $region16: #{tpu_custom_call.1} parent=11 // pred_fallthru
          _
        // Predicated region
        $region17: #{tpu_custom_call.1} parent=11 // pred_check
          %p146 = pneg %p81
        $region18: #{tpu_custom_call.1} parent=11 // pred_check_branch
          %148 = sbr.rel (%p146) target = $region20
        $region19: #{tpu_custom_call.1} parent=11 // pred_region
          _
        $region20: #{tpu_custom_call.1} parent=11 // pred_fallthru
          _
        // Predicated region
        $region21: #{tpu_custom_call.1} parent=11 // pred_check
          %p149 = pneg %p102
        $region22: #{tpu_custom_call.1} parent=11 // pred_check_branch
          %151 = sbr.rel (%p149) target = $region24
        $region23: #{tpu_custom_call.1} parent=11 // pred_region
          _
        $region24: #{tpu_custom_call.1} parent=11 // pred_fallthru
          _
      $region12: #{tpu_custom_call.1} parent=5 // pred_fallthru
        _
      %p152 = scmp.lt.s32.totalorder %s13, 2
      // Predicated region
      $region25: #{tpu_custom_call.1} parent=5 // pred_check
        %p153 = pneg %p152
      $region26: #{tpu_custom_call.1} parent=5 // pred_check_branch
        %155 = sbr.rel (%p153) target = $region28
      $region27: #{tpu_custom_call.1} parent=5 // pred_region
        // Predicated region
        $region29: #{tpu_custom_call.1} parent=27 // pred_check
          %p156 = pneg %p33
        $region30: #{tpu_custom_call.1} parent=27 // pred_check_branch
          %158 = sbr.rel (%p156) target = $region32
        $region31: #{tpu_custom_call.1} parent=27 // pred_region
          %p159 = scmp.lt.s32.totalorder %s13, 1
          %s160 = scalar_select %p159, %s13, 1
          %s161 = smul.addr %s160, 2
          %s162 = smul.addr %s161, 4
          %s163 = scalar_lea.vmem %s0, %s162
        $region32: #{tpu_custom_call.1} parent=27 // pred_fallthru
          _
      $region28: #{tpu_custom_call.1} parent=5 // pred_fallthru
        _
      %p164 = scmp.le.s32.totalorder 1, %s13
      %p165 = scmp.lt.s32.totalorder %s13, 3
      %p166 = pnand %p164, %p165
      %p167 = pneg %p166
      // Predicated region
      $region33: #{tpu_custom_call.1} parent=5 // pred_check
        _
      $region34: #{tpu_custom_call.1} parent=5 // pred_check_branch
        %169 = sbr.rel (%p166) target = $region36
      $region35: #{tpu_custom_call.1} parent=5 // pred_region
        %s170 = ssub.s32 %s13, 1
        %p171 = scmp.lt.s32.totalorder %s18, 1
        %s172 = scalar_select %p171, %s18, 1
        %s173 = smul.addr %s172, 2
        %s174 = smul.addr %s173, 4
        %s175 = scalar_lea.vmem %s0, %s174
        %p176 = pneg %p39
        %p177 = pneg %p36
        %p178 = pneg %p60
        %p179 = pneg %p57
        %p180 = pneg %p81
        %p181 = pneg %p78
        %p182 = pneg %p102
        %p183 = pneg %p99
        %p184 = pneg %p128
        %p185 = pneg %p125
        %s186 = sand.u32 %s115, 1
        %s187 = scalar_lea.sflag [#allocation3], %s186
        %s188 = sand.u32 %s115, 1
        %s189 = smul.addr %s188, 16
        %s190 = scalar_lea.vmem [#allocation2], %s189
        %p191 = scmp.lt.s32.totalorder %s18, 1
        %s192 = scalar_select %p191, %s18, 1
        %s193 = smul.addr %s192, 2
        %s194 = smul.addr %s193, 4
        %s195 = scalar_lea.vmem %s0, %s194
        %v196 = vld [vmem:[%s195] sm:$0xff]
        %v198 = vcombine.high %v196, %v196
        %200 = vst [vmem:[%s190] sm:$0xf] %v196
        %201 = vst [vmem:[%s190 + $0x8] sm:$0xf] %v198
        %v202 = vlaneseq
        %v203 = vand.u32 %v202, 127
        %v204 = vadd.s32 %v203, 128
        %v205 = vld [vmem:[%s1] sm:$0x3]
        %206 = vrot.lane.b32.xlu0 %v196, 17
        %v207 = vpop.permute.xlu0 %206
        %208 = vrot.lane.b32.xlu0 %v198, 17
        %v209 = vpop.permute.xlu0 %208
        %vm210 = vcmp.lt.s32.totalorder %v203, 17
        %v211 = vsel %vm210, %v207, %v209
        %v212 = vsel %vm210, %v209, %v207
        %vm213 = vcmp.ge.s32.totalorder %v203, 16
        %vm214 = vcmp.ge.s32.totalorder %v204, 16
        %vm215 = vcmp.ge.s32.totalorder %v205, 1
        %v216 = vsel %vm215, 1, 0
        %v217 = vlaneseq
        %v218 = vshrl.u32 %v217, 7
        %v219 = vsub.s32 0, %v218
        %v220 = vrot.slane %v216, %v219
        %v221 = vlaneseq
        %v222 = vshrl.u32 %v221, 7
        %v223 = vsub.s32 1, %v222
        %v224 = vrot.slane %v216, %v223
        %vm225 = vcmp.ne.s32.totalorder %v220, 0
        %vm226 = vcmp.ne.s32.totalorder %v224, 0
        %vm227 = vmand %vm213, %vm225
        %vm228 = vmand %vm214, %vm226
        %v229 = vsel %vm227, 1, 0
        %v230 = vsel %vm228, 1, 0
        %v231 = vlaneseq
        %v232 = vshrl.u32 %v231, 7
        %v233 = vsub.s32 0, %v232
        %v234 = vrot.slane %v229, %v233
        %v235 = vlaneseq
        %v236 = vshrl.u32 %v235, 7
        %v237 = vsub.s32 0, %v236
        %v238 = vrot.slane %v230, %v237
        %vm239 = vcmp.eq.s32.totalorder %v234, 1
        %vm240 = vcmp.eq.s32.totalorder %v238, 1
        %v241 = vsel %vm239, %v212, 0.0
        %v242 = vsel %vm240, %v211, 0.0
        %v243 = vld [vmem:[%s2] sm:$0xf]
        %244 = vrot.lane.b32.xlu0 %v196, 16
        %v245 = vpop.permute.xlu0 %244
        %246 = vrot.lane.b32.xlu0 %v198, 16
        %v247 = vpop.permute.xlu0 %246
        %vm248 = vcmp.lt.s32.totalorder %v203, 16
        %v249 = vsel %vm248, %v245, %v247
        %v250 = vsel %vm248, %v247, %v245
        %v251 = vsel %vm213, 1, 0
        %v252 = vsel %vm214, 1, 0
        %vm253 = vcmp.eq.s32.totalorder %v251, 1
        %vm254 = vcmp.eq.s32.totalorder %v252, 1
        %v255 = vsel %vm253, %v250, 0.0
        %v256 = vsel %vm254, %v249, 0.0
        %s257 = scalar_lea.vmem %s2, 4
        %v258 = vld [vmem:[%s257] sm:$0xf]
        %vm259 = vcmask 31744
        %v261 = vsel %vm259, %v258, 0
        %vm263 = vcmask 1043456
        %v265 = vsel %vm263, %v255, 0
        %v268 = vsel %vm263, %v256, 0
        %270 = vmatprep.subr.mxu0 %v268
        %271 = vmatpush1.msra.mxu0 %v265
        %272 = vmatprep.subr.mxu0 0.0
        %273 = vmatpush1.msra.mxu0 0.0
        %274 = vmatprep.subr.mxu0 0.0
        %275 = vmatpush1.msra.mxu0 0.0
        %276 = vmatprep.subr.mxu0 0.0
        %277 = vmatpush1.msra.mxu0 0.0
        %278 = vmatprep.subr.mxu0 0.0
        %279 = vmatpush1.msra.mxu0 0.0
        %280 = vmatprep.subr.mxu0 0.0
        %281 = vmatpush1.msra.mxu0 0.0
        %282 = vmatprep.subr.mxu0 0.0
        %283 = vmatpush1.msra.mxu0 0.0
        %284 = vmatprep.subr.mxu0 0.0
        %285 = vmatpush1.msra.mxu0 0.0
        %286 = vmatprep.subr.mxu0 0.0
        %287 = vmatpush1.msra.mxu0 0.0
        %288 = vmatprep.subr.mxu0 0.0
        %289 = vmatpush1.msra.mxu0 0.0
        %290 = vmatprep.subr.mxu0 0.0
        %291 = vmatpush1.msra.mxu0 0.0
        %292 = vmatprep.subr.mxu0 0.0
        %293 = vmatpush1.msra.mxu0 0.0
        %294 = vmatprep.subr.mxu0 0.0
        %295 = vmatpush1.msra.mxu0 0.0
        %296 = vmatprep.subr.mxu0 0.0
        %297 = vmatpush1.msra.mxu0 0.0
        %298 = vmatprep.subr.mxu0 0.0
        %299 = vmatpush1.msra.mxu0 0.0
        %300 = vmatprep.subr.mxu0 0.0
        %301 = vmatpush1.msra.mxu0 0.0
        %302 = vmatprep.subr.mxu0 0.0
        %303 = vmatpush1.msra.mxu0 0.0
        %304 = vmatprep.subr.mxu0 0.0
        %305 = vmatpush1.msra.mxu0 0.0
        %306 = vmatprep.subr.mxu0 0.0
        %307 = vmatpush1.msra.mxu0 0.0
        %308 = vmatprep.subr.mxu0 0.0
        %309 = vmatpush1.msra.mxu0 0.0
        %310 = vmatprep.subr.mxu0 0.0
        %311 = vmatpush1.msra.mxu0 0.0
        %312 = vmatprep.subr.mxu0 0.0
        %313 = vmatpush1.msra.mxu0 0.0
        %314 = vmatprep.subr.mxu0 0.0
        %315 = vmatpush1.msra.mxu0 0.0
        %316 = vmatprep.subr.mxu0 0.0
        %317 = vmatpush1.msra.mxu0 0.0
        %318 = vmatprep.subr.mxu0 0.0
        %319 = vmatpush1.msra.mxu0 0.0
        %320 = vmatprep.subr.mxu0 0.0
        %321 = vmatpush1.msra.mxu0 0.0
        %322 = vmatprep.subr.mxu0 0.0
        %323 = vmatpush1.msra.mxu0 0.0
        %324 = vmatprep.subr.mxu0 0.0
        %325 = vmatpush1.msra.mxu0 0.0
        %326 = vmatprep.subr.mxu0 0.0
        %327 = vmatpush1.msra.mxu0 0.0
        %328 = vmatprep.subr.mxu0 0.0
        %329 = vmatpush1.msra.mxu0 0.0
        %330 = vmatprep.subr.mxu0 0.0
        %331 = vmatpush1.msra.mxu0 0.0
        %332 = vmatprep.subr.mxu0 0.0
        %333 = vmatpush1.msra.mxu0 0.0
        %334 = vmatprep.mubr.f32.mxu0 0.0
        %335 = vmatmul.mubr.f32.gmra.mrb[0].mxu0 %v261
        %v336 = vpop.f32.mrb[0].mxu0
        %v337 = vadd.f32 0.0, %v336
        %v338 = vpop.f32.mrb[0].mxu0
        %v339 = vadd.f32 0.0, %v338
        %340 = vdwg.mxu0
        %v342 = vsel %vm259, %v243, 0
        %v345 = vsel %vm263, %v241, 0
        %v348 = vsel %vm263, %v242, 0
        %350 = vmatprep.subr.mxu0 %v348
        %351 = vmatpush1.msra.mxu0 %v345
        %352 = vmatprep.subr.mxu0 0.0
        %353 = vmatpush1.msra.mxu0 0.0
        %354 = vmatprep.subr.mxu0 0.0
        %355 = vmatpush1.msra.mxu0 0.0
        %356 = vmatprep.subr.mxu0 0.0
        %357 = vmatpush1.msra.mxu0 0.0
        %358 = vmatprep.subr.mxu0 0.0
        %359 = vmatpush1.msra.mxu0 0.0
        %360 = vmatprep.subr.mxu0 0.0
        %361 = vmatpush1.msra.mxu0 0.0
        %362 = vmatprep.subr.mxu0 0.0
        %363 = vmatpush1.msra.mxu0 0.0
        %364 = vmatprep.subr.mxu0 0.0
        %365 = vmatpush1.msra.mxu0 0.0
        %366 = vmatprep.subr.mxu0 0.0
        %367 = vmatpush1.msra.mxu0 0.0
        %368 = vmatprep.subr.mxu0 0.0
        %369 = vmatpush1.msra.mxu0 0.0
        %370 = vmatprep.subr.mxu0 0.0
        %371 = vmatpush1.msra.mxu0 0.0
        %372 = vmatprep.subr.mxu0 0.0
        %373 = vmatpush1.msra.mxu0 0.0
        %374 = vmatprep.subr.mxu0 0.0
        %375 = vmatpush1.msra.mxu0 0.0
        %376 = vmatprep.subr.mxu0 0.0
        %377 = vmatpush1.msra.mxu0 0.0
        %378 = vmatprep.subr.mxu0 0.0
        %379 = vmatpush1.msra.mxu0 0.0
        %380 = vmatprep.subr.mxu0 0.0
        %381 = vmatpush1.msra.mxu0 0.0
        %382 = vmatprep.subr.mxu0 0.0
        %383 = vmatpush1.msra.mxu0 0.0
        %384 = vmatprep.subr.mxu0 0.0
        %385 = vmatpush1.msra.mxu0 0.0
        %386 = vmatprep.subr.mxu0 0.0
        %387 = vmatpush1.msra.mxu0 0.0
        %388 = vmatprep.subr.mxu0 0.0
        %389 = vmatpush1.msra.mxu0 0.0
        %390 = vmatprep.subr.mxu0 0.0
        %391 = vmatpush1.msra.mxu0 0.0
        %392 = vmatprep.subr.mxu0 0.0
        %393 = vmatpush1.msra.mxu0 0.0
        %394 = vmatprep.subr.mxu0 0.0
        %395 = vmatpush1.msra.mxu0 0.0
        %396 = vmatprep.subr.mxu0 0.0
        %397 = vmatpush1.msra.mxu0 0.0
        %398 = vmatprep.subr.mxu0 0.0
        %399 = vmatpush1.msra.mxu0 0.0
        %400 = vmatprep.subr.mxu0 0.0
        %401 = vmatpush1.msra.mxu0 0.0
        %402 = vmatprep.subr.mxu0 0.0
        %403 = vmatpush1.msra.mxu0 0.0
        %404 = vmatprep.subr.mxu0 0.0
        %405 = vmatpush1.msra.mxu0 0.0
        %406 = vmatprep.subr.mxu0 0.0
        %407 = vmatpush1.msra.mxu0 0.0
        %408 = vmatprep.subr.mxu0 0.0
        %409 = vmatpush1.msra.mxu0 0.0
        %410 = vmatprep.subr.mxu0 0.0
        %411 = vmatpush1.msra.mxu0 0.0
        %412 = vmatprep.subr.mxu0 0.0
        %413 = vmatpush1.msra.mxu0 0.0
        %414 = vmatprep.mubr.f32.mxu0 0.0
        %415 = vmatmul.mubr.f32.gmra.mrb[0].mxu0 %v342
        %v416 = vpop.f32.mrb[0].mxu0
        %v417 = vadd.f32 %v337, %v416
        %v418 = vpop.f32.mrb[0].mxu0
        %v419 = vadd.f32 %v339, %v418
        %420 = vdwg.mxu0
        %421 = vrot.lane.b32.xlu0 %v196, 15
        %v422 = vpop.permute.xlu0 %421
        %423 = vrot.lane.b32.xlu0 %v198, 15
        %v424 = vpop.permute.xlu0 %423
        %vm425 = vcmp.lt.s32.totalorder %v203, 15
        %v426 = vsel %vm425, %v422, %v424
        %v427 = vsel %vm425, %v424, %v422
        %vm428 = vcmp.le.s32.totalorder %v205, 14
        %v429 = vsel %vm428, 1, 0
        %v430 = vlaneseq
        %v431 = vshrl.u32 %v430, 7
        %v432 = vsub.s32 0, %v431
        %v433 = vrot.slane %v429, %v432
        %v434 = vlaneseq
        %v435 = vshrl.u32 %v434, 7
        %v436 = vsub.s32 1, %v435
        %v437 = vrot.slane %v429, %v436
        %vm438 = vcmp.ne.s32.totalorder %v433, 0
        %vm439 = vcmp.ne.s32.totalorder %v437, 0
        %vm440 = vmand %vm213, %vm438
        %vm441 = vmand %vm214, %vm439
        %v442 = vsel %vm440, 1, 0
        %v443 = vsel %vm441, 1, 0
        %v444 = vlaneseq
        %v445 = vshrl.u32 %v444, 7
        %v446 = vsub.s32 0, %v445
        %v447 = vrot.slane %v442, %v446
        %v448 = vlaneseq
        %v449 = vshrl.u32 %v448, 7
        %v450 = vsub.s32 0, %v449
        %v451 = vrot.slane %v443, %v450
        %vm452 = vcmp.eq.s32.totalorder %v447, 1
        %vm453 = vcmp.eq.s32.totalorder %v451, 1
        %v454 = vsel %vm452, %v427, 0.0
        %v455 = vsel %vm453, %v426, 0.0
        %s456 = scalar_lea.vmem %s2, 8
        %v457 = vld [vmem:[%s456] sm:$0xf]
        %v459 = vsel %vm259, %v457, 0
        %v462 = vsel %vm263, %v454, 0
        %v465 = vsel %vm263, %v455, 0
        %467 = vmatprep.subr.mxu0 %v465
        %468 = vmatpush1.msra.mxu0 %v462
        %469 = vmatprep.subr.mxu0 0.0
        %470 = vmatpush1.msra.mxu0 0.0
        %471 = vmatprep.subr.mxu0 0.0
        %472 = vmatpush1.msra.mxu0 0.0
        %473 = vmatprep.subr.mxu0 0.0
        %474 = vmatpush1.msra.mxu0 0.0
        %475 = vmatprep.subr.mxu0 0.0
        %476 = vmatpush1.msra.mxu0 0.0
        %477 = vmatprep.subr.mxu0 0.0
        %478 = vmatpush1.msra.mxu0 0.0
        %479 = vmatprep.subr.mxu0 0.0
        %480 = vmatpush1.msra.mxu0 0.0
        %481 = vmatprep.subr.mxu0 0.0
        %482 = vmatpush1.msra.mxu0 0.0
        %483 = vmatprep.subr.mxu0 0.0
        %484 = vmatpush1.msra.mxu0 0.0
        %485 = vmatprep.subr.mxu0 0.0
        %486 = vmatpush1.msra.mxu0 0.0
        %487 = vmatprep.subr.mxu0 0.0
        %488 = vmatpush1.msra.mxu0 0.0
        %489 = vmatprep.subr.mxu0 0.0
        %490 = vmatpush1.msra.mxu0 0.0
        %491 = vmatprep.subr.mxu0 0.0
        %492 = vmatpush1.msra.mxu0 0.0
        %493 = vmatprep.subr.mxu0 0.0
        %494 = vmatpush1.msra.mxu0 0.0
        %495 = vmatprep.subr.mxu0 0.0
        %496 = vmatpush1.msra.mxu0 0.0
        %497 = vmatprep.subr.mxu0 0.0
        %498 = vmatpush1.msra.mxu0 0.0
        %499 = vmatprep.subr.mxu0 0.0
        %500 = vmatpush1.msra.mxu0 0.0
        %501 = vmatprep.subr.mxu0 0.0
        %502 = vmatpush1.msra.mxu0 0.0
        %503 = vmatprep.subr.mxu0 0.0
        %504 = vmatpush1.msra.mxu0 0.0
        %505 = vmatprep.subr.mxu0 0.0
        %506 = vmatpush1.msra.mxu0 0.0
        %507 = vmatprep.subr.mxu0 0.0
        %508 = vmatpush1.msra.mxu0 0.0
        %509 = vmatprep.subr.mxu0 0.0
        %510 = vmatpush1.msra.mxu0 0.0
        %511 = vmatprep.subr.mxu0 0.0
        %512 = vmatpush1.msra.mxu0 0.0
        %513 = vmatprep.subr.mxu0 0.0
        %514 = vmatpush1.msra.mxu0 0.0
        %515 = vmatprep.subr.mxu0 0.0
        %516 = vmatpush1.msra.mxu0 0.0
        %517 = vmatprep.subr.mxu0 0.0
        %518 = vmatpush1.msra.mxu0 0.0
        %519 = vmatprep.subr.mxu0 0.0
        %520 = vmatpush1.msra.mxu0 0.0
        %521 = vmatprep.subr.mxu0 0.0
        %522 = vmatpush1.msra.mxu0 0.0
        %523 = vmatprep.subr.mxu0 0.0
        %524 = vmatpush1.msra.mxu0 0.0
        %525 = vmatprep.subr.mxu0 0.0
        %526 = vmatpush1.msra.mxu0 0.0
        %527 = vmatprep.subr.mxu0 0.0
        %528 = vmatpush1.msra.mxu0 0.0
        %529 = vmatprep.subr.mxu0 0.0
        %530 = vmatpush1.msra.mxu0 0.0
        %531 = vmatprep.mubr.f32.mxu0 0.0
        %532 = vmatmul.mubr.f32.gmra.mrb[0].mxu0 %v459
        %v533 = vpop.f32.mrb[0].mxu0
        %v534 = vadd.f32 0.0, %v533
        %v535 = vpop.f32.mrb[0].mxu0
        %v536 = vadd.f32 0.0, %v535
        %537 = vdwg.mxu0
        %v538 = vadd.f32 %v417, %v534
        %v539 = vadd.f32 %v419, %v536
        %540 = vrot.lane.b32.xlu0 %v196, 1
        %v541 = vpop.permute.xlu0 %540
        %542 = vrot.lane.b32.xlu0 %v198, 1
        %v543 = vpop.permute.xlu0 %542
        %vm544 = vcmp.lt.s32.totalorder %v203, 1
        %v545 = vsel %vm544, %v541, %v543
        %v546 = vsel %vm544, %v543, %v541
        %vm547 = vcmp.eq.s32.totalorder %v220, 1
        %vm548 = vcmp.eq.s32.totalorder %v224, 1
        %v549 = vsel %vm547, %v546, 0.0
        %v550 = vsel %vm548, %v545, 0.0
        %s551 = scalar_lea.vmem %s2, 12
        %v552 = vld [vmem:[%s551] sm:$0xf]
        %v554 = vsel %vm259, %v552, 0
        %v557 = vsel %vm263, %v549, 0
        %v560 = vsel %vm263, %v550, 0
        %562 = vmatprep.subr.mxu0 %v560
        %563 = vmatpush1.msra.mxu0 %v557
        %564 = vmatprep.subr.mxu0 0.0
        %565 = vmatpush1.msra.mxu0 0.0
        %566 = vmatprep.subr.mxu0 0.0
        %567 = vmatpush1.msra.mxu0 0.0
        %568 = vmatprep.subr.mxu0 0.0
        %569 = vmatpush1.msra.mxu0 0.0
        %570 = vmatprep.subr.mxu0 0.0
        %571 = vmatpush1.msra.mxu0 0.0
        %572 = vmatprep.subr.mxu0 0.0
        %573 = vmatpush1.msra.mxu0 0.0
        %574 = vmatprep.subr.mxu0 0.0
        %575 = vmatpush1.msra.mxu0 0.0
        %576 = vmatprep.subr.mxu0 0.0
        %577 = vmatpush1.msra.mxu0 0.0
        %578 = vmatprep.subr.mxu0 0.0
        %579 = vmatpush1.msra.mxu0 0.0
        %580 = vmatprep.subr.mxu0 0.0
        %581 = vmatpush1.msra.mxu0 0.0
        %582 = vmatprep.subr.mxu0 0.0
        %583 = vmatpush1.msra.mxu0 0.0
        %584 = vmatprep.subr.mxu0 0.0
        %585 = vmatpush1.msra.mxu0 0.0
        %586 = vmatprep.subr.mxu0 0.0
        %587 = vmatpush1.msra.mxu0 0.0
        %588 = vmatprep.subr.mxu0 0.0
        %589 = vmatpush1.msra.mxu0 0.0
        %590 = vmatprep.subr.mxu0 0.0
        %591 = vmatpush1.msra.mxu0 0.0
        %592 = vmatprep.subr.mxu0 0.0
        %593 = vmatpush1.msra.mxu0 0.0
        %594 = vmatprep.subr.mxu0 0.0
        %595 = vmatpush1.msra.mxu0 0.0
        %596 = vmatprep.subr.mxu0 0.0
        %597 = vmatpush1.msra.mxu0 0.0
        %598 = vmatprep.subr.mxu0 0.0
        %599 = vmatpush1.msra.mxu0 0.0
        %600 = vmatprep.subr.mxu0 0.0
        %601 = vmatpush1.msra.mxu0 0.0
        %602 = vmatprep.subr.mxu0 0.0
        %603 = vmatpush1.msra.mxu0 0.0
        %604 = vmatprep.subr.mxu0 0.0
        %605 = vmatpush1.msra.mxu0 0.0
        %606 = vmatprep.subr.mxu0 0.0
        %607 = vmatpush1.msra.mxu0 0.0
        %608 = vmatprep.subr.mxu0 0.0
        %609 = vmatpush1.msra.mxu0 0.0
        %610 = vmatprep.subr.mxu0 0.0
        %611 = vmatpush1.msra.mxu0 0.0
        %612 = vmatprep.subr.mxu0 0.0
        %613 = vmatpush1.msra.mxu0 0.0
        %614 = vmatprep.subr.mxu0 0.0
        %615 = vmatpush1.msra.mxu0 0.0
        %616 = vmatprep.subr.mxu0 0.0
        %617 = vmatpush1.msra.mxu0 0.0
        %618 = vmatprep.subr.mxu0 0.0
        %619 = vmatpush1.msra.mxu0 0.0
        %620 = vmatprep.subr.mxu0 0.0
        %621 = vmatpush1.msra.mxu0 0.0
        %622 = vmatprep.subr.mxu0 0.0
        %623 = vmatpush1.msra.mxu0 0.0
        %624 = vmatprep.subr.mxu0 0.0
        %625 = vmatpush1.msra.mxu0 0.0
        %626 = vmatprep.mubr.f32.mxu0 0.0
        %627 = vmatmul.mubr.f32.gmra.mrb[0].mxu0 %v554
        %v628 = vpop.f32.mrb[0].mxu0
        %v629 = vadd.f32 0.0, %v628
        %v630 = vpop.f32.mrb[0].mxu0
        %v631 = vadd.f32 0.0, %v630
        %632 = vdwg.mxu0
        %v633 = vadd.f32 %v538, %v629
        %v634 = vadd.f32 %v539, %v631
        %s635 = scalar_lea.vmem %s2, 16
        %v636 = vld [vmem:[%s635] sm:$0xf]
        %v638 = vsel %vm259, %v636, 0
        %v640 = vsel %vm263, %v196, 0
        %v642 = vsel %vm263, %v198, 0
        %644 = vmatprep.subr.mxu0 %v642
        %645 = vmatpush1.msra.mxu0 %v640
        %646 = vmatprep.subr.mxu0 0.0
        %647 = vmatpush1.msra.mxu0 0.0
        %648 = vmatprep.subr.mxu0 0.0
        %649 = vmatpush1.msra.mxu0 0.0
        %650 = vmatprep.subr.mxu0 0.0
        %651 = vmatpush1.msra.mxu0 0.0
        %652 = vmatprep.subr.mxu0 0.0
        %653 = vmatpush1.msra.mxu0 0.0
        %654 = vmatprep.subr.mxu0 0.0
        %655 = vmatpush1.msra.mxu0 0.0
        %656 = vmatprep.subr.mxu0 0.0
        %657 = vmatpush1.msra.mxu0 0.0
        %658 = vmatprep.subr.mxu0 0.0
        %659 = vmatpush1.msra.mxu0 0.0
        %660 = vmatprep.subr.mxu0 0.0
        %661 = vmatpush1.msra.mxu0 0.0
        %662 = vmatprep.subr.mxu0 0.0
        %663 = vmatpush1.msra.mxu0 0.0
        %664 = vmatprep.subr.mxu0 0.0
        %665 = vmatpush1.msra.mxu0 0.0
        %666 = vmatprep.subr.mxu0 0.0
        %667 = vmatpush1.msra.mxu0 0.0
        %668 = vmatprep.subr.mxu0 0.0
        %669 = vmatpush1.msra.mxu0 0.0
        %670 = vmatprep.subr.mxu0 0.0
        %671 = vmatpush1.msra.mxu0 0.0
        %672 = vmatprep.subr.mxu0 0.0
        %673 = vmatpush1.msra.mxu0 0.0
        %674 = vmatprep.subr.mxu0 0.0
        %675 = vmatpush1.msra.mxu0 0.0
        %676 = vmatprep.subr.mxu0 0.0
        %677 = vmatpush1.msra.mxu0 0.0
        %678 = vmatprep.subr.mxu0 0.0
        %679 = vmatpush1.msra.mxu0 0.0
        %680 = vmatprep.subr.mxu0 0.0
        %681 = vmatpush1.msra.mxu0 0.0
        %682 = vmatprep.subr.mxu0 0.0
        %683 = vmatpush1.msra.mxu0 0.0
        %684 = vmatprep.subr.mxu0 0.0
        %685 = vmatpush1.msra.mxu0 0.0
        %686 = vmatprep.subr.mxu0 0.0
        %687 = vmatpush1.msra.mxu0 0.0
        %688 = vmatprep.subr.mxu0 0.0
        %689 = vmatpush1.msra.mxu0 0.0
        %690 = vmatprep.subr.mxu0 0.0
        %691 = vmatpush1.msra.mxu0 0.0
        %692 = vmatprep.subr.mxu0 0.0
        %693 = vmatpush1.msra.mxu0 0.0
        %694 = vmatprep.subr.mxu0 0.0
        %695 = vmatpush1.msra.mxu0 0.0
        %696 = vmatprep.subr.mxu0 0.0
        %697 = vmatpush1.msra.mxu0 0.0
        %698 = vmatprep.subr.mxu0 0.0
        %699 = vmatpush1.msra.mxu0 0.0
        %700 = vmatprep.subr.mxu0 0.0
        %701 = vmatpush1.msra.mxu0 0.0
        %702 = vmatprep.subr.mxu0 0.0
        %703 = vmatpush1.msra.mxu0 0.0
        %704 = vmatprep.subr.mxu0 0.0
        %705 = vmatpush1.msra.mxu0 0.0
        %706 = vmatprep.subr.mxu0 0.0
        %707 = vmatpush1.msra.mxu0 0.0
        %708 = vmatprep.mubr.f32.mxu0 0.0
        %709 = vmatmul.mubr.f32.gmra.mrb[0].mxu0 %v638
        %v710 = vpop.f32.mrb[0].mxu0
        %v711 = vadd.f32 0.0, %v710
        %v712 = vpop.f32.mrb[0].mxu0
        %v713 = vadd.f32 0.0, %v712
        %714 = vdwg.mxu0
        %v715 = vadd.f32 %v633, %v711
        %v716 = vadd.f32 %v634, %v713
        %717 = vrot.lane.b32.xlu0 %v196, 127
        %v718 = vpop.permute.xlu0 %717
        %719 = vrot.lane.b32.xlu0 %v198, 127
        %v720 = vpop.permute.xlu0 %719
        %vm721 = vcmp.lt.s32.totalorder %v203, 127
        %v722 = vsel %vm721, %v718, %v720
        %v723 = vsel %vm721, %v720, %v718
        %vm724 = vcmp.eq.s32.totalorder %v433, 1
        %vm725 = vcmp.eq.s32.totalorder %v437, 1
        %v726 = vsel %vm724, %v722, 0.0
        %v727 = vsel %vm725, %v723, 0.0
        %s728 = scalar_lea.vmem %s2, 20
        %v729 = vld [vmem:[%s728] sm:$0xf]
        %v731 = vsel %vm259, %v729, 0
        %v734 = vsel %vm263, %v726, 0
        %v737 = vsel %vm263, %v727, 0
        %739 = vmatprep.subr.mxu0 %v737
        %740 = vmatpush1.msra.mxu0 %v734
        %741 = vmatprep.subr.mxu0 0.0
        %742 = vmatpush1.msra.mxu0 0.0
        %743 = vmatprep.subr.mxu0 0.0
        %744 = vmatpush1.msra.mxu0 0.0
        %745 = vmatprep.subr.mxu0 0.0
        %746 = vmatpush1.msra.mxu0 0.0
        %747 = vmatprep.subr.mxu0 0.0
        %748 = vmatpush1.msra.mxu0 0.0
        %749 = vmatprep.subr.mxu0 0.0
        %750 = vmatpush1.msra.mxu0 0.0
        %751 = vmatprep.subr.mxu0 0.0
        %752 = vmatpush1.msra.mxu0 0.0
        %753 = vmatprep.subr.mxu0 0.0
        %754 = vmatpush1.msra.mxu0 0.0
        %755 = vmatprep.subr.mxu0 0.0
        %756 = vmatpush1.msra.mxu0 0.0
        %757 = vmatprep.subr.mxu0 0.0
        %758 = vmatpush1.msra.mxu0 0.0
        %759 = vmatprep.subr.mxu0 0.0
        %760 = vmatpush1.msra.mxu0 0.0
        %761 = vmatprep.subr.mxu0 0.0
        %762 = vmatpush1.msra.mxu0 0.0
        %763 = vmatprep.subr.mxu0 0.0
        %764 = vmatpush1.msra.mxu0 0.0
        %765 = vmatprep.subr.mxu0 0.0
        %766 = vmatpush1.msra.mxu0 0.0
        %767 = vmatprep.subr.mxu0 0.0
        %768 = vmatpush1.msra.mxu0 0.0
        %769 = vmatprep.subr.mxu0 0.0
        %770 = vmatpush1.msra.mxu0 0.0
        %771 = vmatprep.subr.mxu0 0.0
        %772 = vmatpush1.msra.mxu0 0.0
        %773 = vmatprep.subr.mxu0 0.0
        %774 = vmatpush1.msra.mxu0 0.0
        %775 = vmatprep.subr.mxu0 0.0
        %776 = vmatpush1.msra.mxu0 0.0
        %777 = vmatprep.subr.mxu0 0.0
        %778 = vmatpush1.msra.mxu0 0.0
        %779 = vmatprep.subr.mxu0 0.0
        %780 = vmatpush1.msra.mxu0 0.0
        %781 = vmatprep.subr.mxu0 0.0
        %782 = vmatpush1.msra.mxu0 0.0
        %783 = vmatprep.subr.mxu0 0.0
        %784 = vmatpush1.msra.mxu0 0.0
        %785 = vmatprep.subr.mxu0 0.0
        %786 = vmatpush1.msra.mxu0 0.0
        %787 = vmatprep.subr.mxu0 0.0
        %788 = vmatpush1.msra.mxu0 0.0
        %789 = vmatprep.subr.mxu0 0.0
        %790 = vmatpush1.msra.mxu0 0.0
        %791 = vmatprep.subr.mxu0 0.0
        %792 = vmatpush1.msra.mxu0 0.0
        %793 = vmatprep.subr.mxu0 0.0
        %794 = vmatpush1.msra.mxu0 0.0
        %795 = vmatprep.subr.mxu0 0.0
        %796 = vmatpush1.msra.mxu0 0.0
        %797 = vmatprep.subr.mxu0 0.0
        %798 = vmatpush1.msra.mxu0 0.0
        %799 = vmatprep.subr.mxu0 0.0
        %800 = vmatpush1.msra.mxu0 0.0
        %801 = vmatprep.subr.mxu0 0.0
        %802 = vmatpush1.msra.mxu0 0.0
        %803 = vmatprep.mubr.f32.mxu0 0.0
        %804 = vmatmul.mubr.f32.gmra.mrb[0].mxu0 %v731
        %v805 = vpop.f32.mrb[0].mxu0
        %v806 = vadd.f32 0.0, %v805
        %v807 = vpop.f32.mrb[0].mxu0
        %v808 = vadd.f32 0.0, %v807
        %809 = vdwg.mxu0
        %v810 = vadd.f32 %v715, %v806
        %v811 = vadd.f32 %v716, %v808
        %812 = vrot.lane.b32.xlu0 %v196, 113
        %v813 = vpop.permute.xlu0 %812
        %814 = vrot.lane.b32.xlu0 %v198, 113
        %v815 = vpop.permute.xlu0 %814
        %vm816 = vcmp.lt.s32.totalorder %v203, 113
        %v817 = vsel %vm816, %v813, %v815
        %v818 = vsel %vm816, %v815, %v813
        %vm819 = vcmp.lt.s32.totalorder %v203, 240
        %vm820 = vcmp.lt.s32.totalorder %v204, 240
        %vm821 = vmand %vm819, %vm225
        %vm822 = vmand %vm820, %vm226
        %v823 = vsel %vm821, 1, 0
        %v824 = vsel %vm822, 1, 0
        %v825 = vlaneseq
        %v826 = vshrl.u32 %v825, 7
        %v827 = vsub.s32 0, %v826
        %v828 = vrot.slane %v823, %v827
        %v829 = vlaneseq
        %v830 = vshrl.u32 %v829, 7
        %v831 = vsub.s32 0, %v830
        %v832 = vrot.slane %v824, %v831
        %vm833 = vcmp.eq.s32.totalorder %v828, 1
        %vm834 = vcmp.eq.s32.totalorder %v832, 1
        %v835 = vsel %vm833, %v817, 0.0
        %v836 = vsel %vm834, %v818, 0.0
        %s837 = scalar_lea.vmem %s2, 24
        %v838 = vld [vmem:[%s837] sm:$0xf]
        %v840 = vsel %vm259, %v838, 0
        %v843 = vsel %vm263, %v835, 0
        %v846 = vsel %vm263, %v836, 0
        %848 = vmatprep.subr.mxu0 %v846
        %849 = vmatpush1.msra.mxu0 %v843
        %850 = vmatprep.subr.mxu0 0.0
        %851 = vmatpush1.msra.mxu0 0.0
        %852 = vmatprep.subr.mxu0 0.0
        %853 = vmatpush1.msra.mxu0 0.0
        %854 = vmatprep.subr.mxu0 0.0
        %855 = vmatpush1.msra.mxu0 0.0
        %856 = vmatprep.subr.mxu0 0.0
        %857 = vmatpush1.msra.mxu0 0.0
        %858 = vmatprep.subr.mxu0 0.0
        %859 = vmatpush1.msra.mxu0 0.0
        %860 = vmatprep.subr.mxu0 0.0
        %861 = vmatpush1.msra.mxu0 0.0
        %862 = vmatprep.subr.mxu0 0.0
        %863 = vmatpush1.msra.mxu0 0.0
        %864 = vmatprep.subr.mxu0 0.0
        %865 = vmatpush1.msra.mxu0 0.0
        %866 = vmatprep.subr.mxu0 0.0
        %867 = vmatpush1.msra.mxu0 0.0
        %868 = vmatprep.subr.mxu0 0.0
        %869 = vmatpush1.msra.mxu0 0.0
        %870 = vmatprep.subr.mxu0 0.0
        %871 = vmatpush1.msra.mxu0 0.0
        %872 = vmatprep.subr.mxu0 0.0
        %873 = vmatpush1.msra.mxu0 0.0
        %874 = vmatprep.subr.mxu0 0.0
        %875 = vmatpush1.msra.mxu0 0.0
        %876 = vmatprep.subr.mxu0 0.0
        %877 = vmatpush1.msra.mxu0 0.0
        %878 = vmatprep.subr.mxu0 0.0
        %879 = vmatpush1.msra.mxu0 0.0
        %880 = vmatprep.subr.mxu0 0.0
        %881 = vmatpush1.msra.mxu0 0.0
        %882 = vmatprep.subr.mxu0 0.0
        %883 = vmatpush1.msra.mxu0 0.0
        %884 = vmatprep.subr.mxu0 0.0
        %885 = vmatpush1.msra.mxu0 0.0
        %886 = vmatprep.subr.mxu0 0.0
        %887 = vmatpush1.msra.mxu0 0.0
        %888 = vmatprep.subr.mxu0 0.0
        %889 = vmatpush1.msra.mxu0 0.0
        %890 = vmatprep.subr.mxu0 0.0
        %891 = vmatpush1.msra.mxu0 0.0
        %892 = vmatprep.subr.mxu0 0.0
        %893 = vmatpush1.msra.mxu0 0.0
        %894 = vmatprep.subr.mxu0 0.0
        %895 = vmatpush1.msra.mxu0 0.0
        %896 = vmatprep.subr.mxu0 0.0
        %897 = vmatpush1.msra.mxu0 0.0
        %898 = vmatprep.subr.mxu0 0.0
        %899 = vmatpush1.msra.mxu0 0.0
        %900 = vmatprep.subr.mxu0 0.0
        %901 = vmatpush1.msra.mxu0 0.0
        %902 = vmatprep.subr.mxu0 0.0
        %903 = vmatpush1.msra.mxu0 0.0
        %904 = vmatprep.subr.mxu0 0.0
        %905 = vmatpush1.msra.mxu0 0.0
        %906 = vmatprep.subr.mxu0 0.0
        %907 = vmatpush1.msra.mxu0 0.0
        %908 = vmatprep.subr.mxu0 0.0
        %909 = vmatpush1.msra.mxu0 0.0
        %910 = vmatprep.subr.mxu0 0.0
        %911 = vmatpush1.msra.mxu0 0.0
        %912 = vmatprep.mubr.f32.mxu0 0.0
        %913 = vmatmul.mubr.f32.gmra.mrb[0].mxu0 %v840
        %v914 = vpop.f32.mrb[0].mxu0
        %v915 = vadd.f32 0.0, %v914
        %v916 = vpop.f32.mrb[0].mxu0
        %v917 = vadd.f32 0.0, %v916
        %918 = vdwg.mxu0
        %v919 = vadd.f32 %v810, %v915
        %v920 = vadd.f32 %v811, %v917
        %921 = vrot.lane.b32.xlu0 %v196, 112
        %v922 = vpop.permute.xlu0 %921
        %923 = vrot.lane.b32.xlu0 %v198, 112
        %v924 = vpop.permute.xlu0 %923
        %vm925 = vcmp.lt.s32.totalorder %v203, 112
        %v926 = vsel %vm925, %v922, %v924
        %v927 = vsel %vm925, %v924, %v922
        %v928 = vsel %vm819, 1, 0
        %v929 = vsel %vm820, 1, 0
        %vm930 = vcmp.eq.s32.totalorder %v928, 1
        %vm931 = vcmp.eq.s32.totalorder %v929, 1
        %v932 = vsel %vm930, %v926, 0.0
        %v933 = vsel %vm931, %v927, 0.0
        %s934 = scalar_lea.vmem %s2, 28
        %v935 = vld [vmem:[%s934] sm:$0xf]
        %v937 = vsel %vm259, %v935, 0
        %v940 = vsel %vm263, %v932, 0
        %v943 = vsel %vm263, %v933, 0
        %945 = vmatprep.subr.mxu0 %v943
        %946 = vmatpush1.msra.mxu0 %v940
        %947 = vmatprep.subr.mxu0 0.0
        %948 = vmatpush1.msra.mxu0 0.0
        %949 = vmatprep.subr.mxu0 0.0
        %950 = vmatpush1.msra.mxu0 0.0
        %951 = vmatprep.subr.mxu0 0.0
        %952 = vmatpush1.msra.mxu0 0.0
        %953 = vmatprep.subr.mxu0 0.0
        %954 = vmatpush1.msra.mxu0 0.0
        %955 = vmatprep.subr.mxu0 0.0
        %956 = vmatpush1.msra.mxu0 0.0
        %957 = vmatprep.subr.mxu0 0.0
        %958 = vmatpush1.msra.mxu0 0.0
        %959 = vmatprep.subr.mxu0 0.0
        %960 = vmatpush1.msra.mxu0 0.0
        %961 = vmatprep.subr.mxu0 0.0
        %962 = vmatpush1.msra.mxu0 0.0
        %963 = vmatprep.subr.mxu0 0.0
        %964 = vmatpush1.msra.mxu0 0.0
        %965 = vmatprep.subr.mxu0 0.0
        %966 = vmatpush1.msra.mxu0 0.0
        %967 = vmatprep.subr.mxu0 0.0
        %968 = vmatpush1.msra.mxu0 0.0
        %969 = vmatprep.subr.mxu0 0.0
        %970 = vmatpush1.msra.mxu0 0.0
        %971 = vmatprep.subr.mxu0 0.0
        %972 = vmatpush1.msra.mxu0 0.0
        %973 = vmatprep.subr.mxu0 0.0
        %974 = vmatpush1.msra.mxu0 0.0
        %975 = vmatprep.subr.mxu0 0.0
        %976 = vmatpush1.msra.mxu0 0.0
        %977 = vmatprep.subr.mxu0 0.0
        %978 = vmatpush1.msra.mxu0 0.0
        %979 = vmatprep.subr.mxu0 0.0
        %980 = vmatpush1.msra.mxu0 0.0
        %981 = vmatprep.subr.mxu0 0.0
        %982 = vmatpush1.msra.mxu0 0.0
        %983 = vmatprep.subr.mxu0 0.0
        %984 = vmatpush1.msra.mxu0 0.0
        %985 = vmatprep.subr.mxu0 0.0
        %986 = vmatpush1.msra.mxu0 0.0
        %987 = vmatprep.subr.mxu0 0.0
        %988 = vmatpush1.msra.mxu0 0.0
        %989 = vmatprep.subr.mxu0 0.0
        %990 = vmatpush1.msra.mxu0 0.0
        %991 = vmatprep.subr.mxu0 0.0
        %992 = vmatpush1.msra.mxu0 0.0
        %993 = vmatprep.subr.mxu0 0.0
        %994 = vmatpush1.msra.mxu0 0.0
        %995 = vmatprep.subr.mxu0 0.0
        %996 = vmatpush1.msra.mxu0 0.0
        %997 = vmatprep.subr.mxu0 0.0
        %998 = vmatpush1.msra.mxu0 0.0
        %999 = vmatprep.subr.mxu0 0.0
        %1000 = vmatpush1.msra.mxu0 0.0
        %1001 = vmatprep.subr.mxu0 0.0
        %1002 = vmatpush1.msra.mxu0 0.0
        %1003 = vmatprep.subr.mxu0 0.0
        %1004 = vmatpush1.msra.mxu0 0.0
        %1005 = vmatprep.subr.mxu0 0.0
        %1006 = vmatpush1.msra.mxu0 0.0
        %1007 = vmatprep.subr.mxu0 0.0
        %1008 = vmatpush1.msra.mxu0 0.0
        %1009 = vmatprep.mubr.f32.mxu0 0.0
        %1010 = vmatmul.mubr.f32.gmra.mrb[0].mxu0 %v937
        %v1011 = vpop.f32.mrb[0].mxu0
        %v1012 = vadd.f32 0.0, %v1011
        %v1013 = vpop.f32.mrb[0].mxu0
        %v1014 = vadd.f32 0.0, %v1013
        %1015 = vdwg.mxu0
        %v1016 = vadd.f32 %v919, %v1012
        %v1017 = vadd.f32 %v920, %v1014
        %1018 = vrot.lane.b32.xlu0 %v196, 111
        %v1019 = vpop.permute.xlu0 %1018
        %1020 = vrot.lane.b32.xlu0 %v198, 111
        %v1021 = vpop.permute.xlu0 %1020
        %vm1022 = vcmp.lt.s32.totalorder %v203, 111
        %v1023 = vsel %vm1022, %v1019, %v1021
        %v1024 = vsel %vm1022, %v1021, %v1019
        %vm1025 = vmand %vm819, %vm438
        %vm1026 = vmand %vm820, %vm439
        %v1027 = vsel %vm1025, 1, 0
        %v1028 = vsel %vm1026, 1, 0
        %v1029 = vlaneseq
        %v1030 = vshrl.u32 %v1029, 7
        %v1031 = vsub.s32 0, %v1030
        %v1032 = vrot.slane %v1027, %v1031
        %v1033 = vlaneseq
        %v1034 = vshrl.u32 %v1033, 7
        %v1035 = vsub.s32 0, %v1034
        %v1036 = vrot.slane %v1028, %v1035
        %vm1037 = vcmp.eq.s32.totalorder %v1032, 1
        %vm1038 = vcmp.eq.s32.totalorder %v1036, 1
        %v1039 = vsel %vm1037, %v1023, 0.0
        %v1040 = vsel %vm1038, %v1024, 0.0
        %s1041 = scalar_lea.vmem %s2, 32
        %v1042 = vld [vmem:[%s1041] sm:$0xf]
        %v1044 = vsel %vm259, %v1042, 0
        %v1047 = vsel %vm263, %v1039, 0
        %v1050 = vsel %vm263, %v1040, 0
        %1052 = vmatprep.subr.mxu0 %v1050
        %1053 = vmatpush1.msra.mxu0 %v1047
        %1054 = vmatprep.subr.mxu0 0.0
        %1055 = vmatpush1.msra.mxu0 0.0
        %1056 = vmatprep.subr.mxu0 0.0
        %1057 = vmatpush1.msra.mxu0 0.0
        %1058 = vmatprep.subr.mxu0 0.0
        %1059 = vmatpush1.msra.mxu0 0.0
        %1060 = vmatprep.subr.mxu0 0.0
        %1061 = vmatpush1.msra.mxu0 0.0
        %1062 = vmatprep.subr.mxu0 0.0
        %1063 = vmatpush1.msra.mxu0 0.0
        %1064 = vmatprep.subr.mxu0 0.0
        %1065 = vmatpush1.msra.mxu0 0.0
        %1066 = vmatprep.subr.mxu0 0.0
        %1067 = vmatpush1.msra.mxu0 0.0
        %1068 = vmatprep.subr.mxu0 0.0
        %1069 = vmatpush1.msra.mxu0 0.0
        %1070 = vmatprep.subr.mxu0 0.0
        %1071 = vmatpush1.msra.mxu0 0.0
        %1072 = vmatprep.subr.mxu0 0.0
        %1073 = vmatpush1.msra.mxu0 0.0
        %1074 = vmatprep.subr.mxu0 0.0
        %1075 = vmatpush1.msra.mxu0 0.0
        %1076 = vmatprep.subr.mxu0 0.0
        %1077 = vmatpush1.msra.mxu0 0.0
        %1078 = vmatprep.subr.mxu0 0.0
        %1079 = vmatpush1.msra.mxu0 0.0
        %1080 = vmatprep.subr.mxu0 0.0
        %1081 = vmatpush1.msra.mxu0 0.0
        %1082 = vmatprep.subr.mxu0 0.0
        %1083 = vmatpush1.msra.mxu0 0.0
        %1084 = vmatprep.subr.mxu0 0.0
        %1085 = vmatpush1.msra.mxu0 0.0
        %1086 = vmatprep.subr.mxu0 0.0
        %1087 = vmatpush1.msra.mxu0 0.0
        %1088 = vmatprep.subr.mxu0 0.0
        %1089 = vmatpush1.msra.mxu0 0.0
        %1090 = vmatprep.subr.mxu0 0.0
        %1091 = vmatpush1.msra.mxu0 0.0
        %1092 = vmatprep.subr.mxu0 0.0
        %1093 = vmatpush1.msra.mxu0 0.0
        %1094 = vmatprep.subr.mxu0 0.0
        %1095 = vmatpush1.msra.mxu0 0.0
        %1096 = vmatprep.subr.mxu0 0.0
        %1097 = vmatpush1.msra.mxu0 0.0
        %1098 = vmatprep.subr.mxu0 0.0
        %1099 = vmatpush1.msra.mxu0 0.0
        %1100 = vmatprep.subr.mxu0 0.0
        %1101 = vmatpush1.msra.mxu0 0.0
        %1102 = vmatprep.subr.mxu0 0.0
        %1103 = vmatpush1.msra.mxu0 0.0
        %1104 = vmatprep.subr.mxu0 0.0
        %1105 = vmatpush1.msra.mxu0 0.0
        %1106 = vmatprep.subr.mxu0 0.0
        %1107 = vmatpush1.msra.mxu0 0.0
        %1108 = vmatprep.subr.mxu0 0.0
        %1109 = vmatpush1.msra.mxu0 0.0
        %1110 = vmatprep.subr.mxu0 0.0
        %1111 = vmatpush1.msra.mxu0 0.0
        %1112 = vmatprep.subr.mxu0 0.0
        %1113 = vmatpush1.msra.mxu0 0.0
        %1114 = vmatprep.subr.mxu0 0.0
        %1115 = vmatpush1.msra.mxu0 0.0
        %1116 = vmatprep.mubr.f32.mxu0 0.0
        %1117 = vmatmul.mubr.f32.gmra.mrb[0].mxu0 %v1044
        %v1118 = vpop.f32.mrb[0].mxu0
        %v1119 = vadd.f32 0.0, %v1118
        %v1120 = vpop.f32.mrb[0].mxu0
        %v1121 = vadd.f32 0.0, %v1120
        %1122 = vdwg.mxu0
        %v1123 = vadd.f32 %v1016, %v1119
        %v1124 = vadd.f32 %v1017, %v1121
        %v1125 = vld [vmem:[%s3] sm:$0xf]
        %1127 = vset.pattern.permute.xlu0 0
        %1128 = vperm.xlu0 %1127, %v1125
        %v1129 = vpop.permute.xlu0 %1128
        %v1131 = vadd.f32 %v1123, %v1129
        %v1132 = vadd.f32 %v1124, %v1129
        %v1135 = vrot.slane %v1131, 4
        %v1136 = vrot.slane %v1132, 4
        %1139 = vst [vmem:[%s190] sm:$0xf0] %v1135
        %1140 = vst [vmem:[%s190 + $0x8] sm:$0xf0] %v1136
        %s1141 = sand.u32 %s115, 1
        %s1142 = scalar_lea.sflag [#allocation3], %s1141
        %s1143 = sand.u32 %s115, 1
        %s1144 = smul.addr %s1143, 16
        %s1145 = scalar_lea.vmem [#allocation2], %s1144
        // Predicated region
        $region37: #{tpu_custom_call.1} parent=35 // pred_check
          %p1146 = pneg %p125
        $region38: #{tpu_custom_call.1} parent=35 // pred_check_branch
          %1148 = sbr.rel (%p1146) target = $region40
        $region39: #{tpu_custom_call.1} parent=35 // pred_region
          %s1150 = ssub.s32 256, 256
          %1151 = vsyncadd %s1142, %s1150
          %s1152 = smul.addr %s18, 2
          %s1153 = smul.addr %s1152, 128
          %s1154 = scalar_lea.hbm %s4, %s1153
          %s1156 = sshll.u32 %s1145, 4
          %s1157 = int_to_ptr.vmem [resolvable:$true] %s1156
          %1159 = dma.vmem_to_hbm [thread:$0]  %s1157, 256, %s1154, %s1142
        $region40: #{tpu_custom_call.1} parent=35 // pred_fallthru
          _
      $region36: #{tpu_custom_call.1} parent=5 // pred_fallthru
        _
      %p1160 = scmp.le.s32.totalorder 2, %s13
      // Predicated region
      $region41: #{tpu_custom_call.1} parent=5 // pred_check
        %p1161 = pneg %p1160
      $region42: #{tpu_custom_call.1} parent=5 // pred_check_branch
        %1163 = sbr.rel (%p1161) target = $region44
      $region43: #{tpu_custom_call.1} parent=5 // pred_region
        %s1164 = ssub.s32 %s13, 2
        // Predicated region
        $region45: #{tpu_custom_call.1} parent=43 // pred_check
          %p1165 = pneg %p131
        $region46: #{tpu_custom_call.1} parent=43 // pred_check_branch
          %1167 = sbr.rel (%p1165) target = $region48
        $region47: #{tpu_custom_call.1} parent=43 // pred_region
          %s1168 = sand.u32 %s116, 1
          %s1169 = scalar_lea.sflag [#allocation3], %s1168
          %s1170 = sand.u32 %s116, 1
          %s1171 = smul.addr %s1170, 16
          %s1172 = scalar_lea.vmem [#allocation2], %s1171
          %1173 = dma.done %s1169, 256
        $region48: #{tpu_custom_call.1} parent=43 // pred_fallthru
          _
      $region44: #{tpu_custom_call.1} parent=5 // pred_fallthru
        _
    $region6: #{tpu_custom_call.1} parent=1 // loop_footer
      %s17 = sadd.s32 1, %s13
    $region7: #{tpu_custom_call.1} parent=1 // loop_footer_branch
      %12 = sbr.rel target = $region3
    $region8: #{tpu_custom_call.1} parent=1 // loop_exit
      _
    %1174 = vsyncpa [#allocation3], 1
    %s1175 = scalar_lea.sflag [#allocation3], 1
    %1176 = vsyncpa %s1175, 1

</llo_original>
